<compile_context>
chip_gen: v5e
topology: v5e:2x2
jax: 0.10.0
libtpu: 0.0.40
codegen_flags: <defaults>
</compile_context>

<pallas_src>
import jax
import jax.numpy as jnp
from jax.experimental import pallas as pl
from jax.experimental.pallas import tpu as pltpu

LEVELS = 3
KSIZE = 5
SIGMA = 1.0


# ----------------------------- operators --------------------------------------
def _gaussian_1d():
    xs = jnp.arange(KSIZE, dtype=jnp.float32) - (KSIZE - 1) / 2.0
    k = jnp.exp(-(xs ** 2) / (2.0 * SIGMA ** 2))
    return k / jnp.sum(k)


def _blur_pool_matrix(n):
    """(n//2, n) matrix == avg_pool(2,2) o depthwise 5-tap Gaussian blur (zero pad)."""
    k1d = _gaussian_1d()
    idx = jnp.arange(n)
    diff = idx[None, :] - idx[:, None] + (KSIZE - 1) // 2
    band = jnp.where((diff >= 0) & (diff < KSIZE),
                     k1d[jnp.clip(diff, 0, KSIZE - 1)], 0.0).astype(jnp.float32)
    m = n // 2
    pool = jnp.zeros((m, n), jnp.float32)
    pool = pool.at[jnp.arange(m), 2 * jnp.arange(m)].set(0.5)
    pool = pool.at[jnp.arange(m), 2 * jnp.arange(m) + 1].set(0.5)
    return pool @ band  # (n//2, n)


# ----------------------------- sizing helpers ----------------------------------
def _vmem_budget_bytes():
    """(usable budget, physical) per-TensorCore VMEM. Conservative v7x fallback."""
    phys = 64 * 1024 * 1024
    try:
        cap = getattr(pltpu.get_tpu_info(), "vmem_capacity_bytes", None)
        if cap:
            phys = int(cap)
    except Exception:
        pass
    budget = max(phys - 16 * 1024 * 1024, 32 * 1024 * 1024)  # headroom for scratch
    return budget, phys


def _chunk_vmem_bytes(bc, sizes, in_itemsize, out_itemsize, mat_itemsize):
    """Estimated VMEM for one grid step (2x buffers on every pipelined block)."""
    b = 2 * bc * sizes[0][0] * sizes[0][1] * in_itemsize          # input block
    for (h, w) in sizes[1:]:
        b += 2 * bc * h * w * out_itemsize                        # output blocks
    for k in range(len(sizes) - 1):
        (hp, wp), (ho, wo) = sizes[k], sizes[k + 1]
        b += 2 * (ho * hp + wp * wo) * mat_itemsize               # operators
        # (pipeline_mode=pl.Buffered(1) would halve this; not load-bearing now)
    # live f32 intermediates at the widest level: cur, t, broadcast L, result
    (hp, wp), (ho, wo) = sizes[0], sizes[1]
    b += bc * (hp * wp + hp * wo + ho * hp + ho * wo) * 4
    return b


def _choose_bc(BC, sizes, in_itemsize, out_itemsize, mat_itemsize, budget):
    """Largest images-per-step that fits VMEM, with >=2 grid steps when BC >= 2."""
    if BC <= 1:
        return max(BC, 1)
    fits = [bc for bc in range(1, BC + 1)
            if _chunk_vmem_bytes(bc, sizes, in_itemsize, out_itemsize,
                                 mat_itemsize) <= budget]
    if not fits:
        return 1  # last resort: smallest chunk; vmem_limit is raised to need below

    def multi(bc):  # >= 2 grid steps so ("parallel",) shards across 2 TCs on v7x
        return -(-BC // bc) >= 2

    divisors = [bc for bc in fits if BC % bc == 0 and multi(bc)]
    if divisors:
        return max(divisors)           # biggest tile, no padding
    non_div = [bc for bc in fits if multi(bc)]
    if non_div:
        return max(non_div)            # biggest tile, pad the BC axis
    return max(fits)


# ------------------------------- kernel ----------------------------------------
def _make_pyramid_kernel(num_down, bc, sizes, compute_dtype):
    def kernel(*refs):
        x_ref = refs[0]
        mat_refs = refs[1:1 + 2 * num_down]
        out_refs = refs[1 + 2 * num_down:]

        cur = x_ref[...].astype(jnp.float32)                       # (bc, H, W)
        for k in range(num_down):
            hp, wp = sizes[k]
            ho, wo = sizes[k + 1]
            l_mat = mat_refs[2 * k][...]                            # (ho, hp)
            r_mat = mat_refs[2 * k + 1][...]                        # (wp, wo) = R^T

            # column pass: per-image X @ R^T, bc-batched, exact FLOPs.
            r_b = jnp.broadcast_to(r_mat[None, :, :], (bc, wp, wo)).astype(compute_dtype)
            t = jnp.einsum('bhw,bwv->bhv', cur.astype(compute_dtype), r_b,
                           preferred_element_type=jnp.float32)      # (bc, hp, wo)

            # row pass: per-image L @ T, bc-batched, exact FLOPs (no block-diag).
            l_b = jnp.broadcast_to(l_mat[None, :, :], (bc, ho, hp)).astype(compute_dtype)
            cur = jnp.einsum('boh,bhv->bov', l_b, t.astype(compute_dtype),
                             preferred_element_type=jnp.float32)    # (bc, ho, wo)

            # level stays in VMEM/vregs for the next iteration; written once.
            out_refs[k][...] = cur.astype(out_refs[k].dtype)
    return kernel


# ------------------------------- wrapper ----------------------------------------
def enhanced_pyramid(x, levels=LEVELS, compute_dtype=jnp.float32):
    """Pallas forward of EnhancedPyramidLayer: returns [x, down1, down2, ...]."""
    if levels <= 1:
        return [x]

    B, C, H, W = x.shape
    BC = B * C
    num_down = levels - 1

    # Per-level spatial sizes (avg_pool floors odd dims, matching PyTorch).
    sizes = [(H, W)]
    for _ in range(num_down):
        h, w = sizes[-1]
        sizes.append((h // 2, w // 2))

    in_itemsize = jnp.dtype(x.dtype).itemsize
    out_itemsize = in_itemsize
    mat_itemsize = jnp.dtype(compute_dtype).itemsize

    budget, phys = _vmem_budget_bytes()
    bc = _choose_bc(BC, sizes, in_itemsize, out_itemsize, mat_itemsize, budget)
    num_chunks = -(-BC // bc)
    BCp = num_chunks * bc

    # Small per-axis operators (built once in plain JAX; no kron).
    mats = []
    for k in range(num_down):
        hp, wp = sizes[k]
        l_mat = _blur_pool_matrix(hp)                      # (hp//2, hp)
        r_mat = _blur_pool_matrix(wp).T                    # (wp, wp//2), pre-transposed
        mats += [l_mat.astype(compute_dtype), r_mat.astype(compute_dtype)]

    # Natural sublane-stacked layout: free reshape of NCHW, no transposes.
    xs = x.reshape(BC, H, W)
    if BCp != BC:
        xs = jnp.pad(xs, ((0, BCp - BC), (0, 0), (0, 0)))

    in_specs = [pl.BlockSpec((bc, H, W), lambda i: (i, 0, 0))]
    for m in mats:
        in_specs.append(pl.BlockSpec(m.shape, lambda i: (0, 0)))

    out_specs, out_shape = [], []
    for k in range(num_down):
        ho, wo = sizes[k + 1]
        out_specs.append(pl.BlockSpec((bc, ho, wo), lambda i: (i, 0, 0)))
        out_shape.append(jax.ShapeDtypeStruct((BCp, ho, wo), x.dtype))

    # Exact (kron-free) cost estimate + VMEM limit from the actual per-chunk need.
    flops = 0
    bytes_accessed = BCp * H * W * in_itemsize
    for k in range(num_down):
        (hp, wp), (ho, wo) = sizes[k], sizes[k + 1]
        flops += 2 * BCp * (hp * wp * wo + ho * hp * wo)
        bytes_accessed += BCp * ho * wo * out_itemsize
        bytes_accessed += (ho * hp + wp * wo) * mat_itemsize
    need = _chunk_vmem_bytes(bc, sizes, in_itemsize, out_itemsize, mat_itemsize)
    vmem_limit = int(min(max(2 * need, 32 * 1024 * 1024), budget))
    vmem_limit = int(max(vmem_limit, min(need + (2 << 20), phys)))

    outs = pl.pallas_call(
        _make_pyramid_kernel(num_down, bc, sizes, compute_dtype),
        out_shape=tuple(out_shape),
        grid_spec=pltpu.PrefetchScalarGridSpec(
            num_scalar_prefetch=0,
            grid=(num_chunks,),
            in_specs=in_specs,
            out_specs=tuple(out_specs),
        ),
        compiler_params=pltpu.CompilerParams(
            dimension_semantics=("parallel",),
            vmem_limit_bytes=vmem_limit),
        cost_estimate=pl.CostEstimate(
            flops=int(flops), transcendentals=0,
            bytes_accessed=int(bytes_accessed)),
    )(xs, *mats)

    # Free reshapes back to NCHW (+ un-pad if the BC axis was padded).
    pyramid = [x]
    for k in range(num_down):
        ho, wo = sizes[k + 1]
        y = outs[k]
        if BCp != BC:
            y = y[:BC]
        pyramid.append(y.reshape(B, C, ho, wo))
    return pyramid


# ---- pure-JAX reference (mirrors the PyTorch forward exactly) ------------------
def _ref_pyramid(x, levels=LEVELS):
    k1 = _gaussian_1d()
    k2 = jnp.outer(k1, k1)
    pyr = [x]
    cur = x
    for _ in range(levels - 1):
        C = cur.shape[1]
        kern = jnp.broadcast_to(k2[None, None], (C, 1, KSIZE, KSIZE))
        blurred = jax.lax.conv_general_dilated(
            cur, kern, window_strides=(1, 1), padding=((2, 2), (2, 2)),
            feature_group_count=C,
            dimension_numbers=("NCHW", "OIHW", "NCHW"))
        B, C2, H, W = blurred.shape
        pooled = blurred.reshape(B, C2, H // 2, 2, W // 2, 2).mean(axis=(3, 5))
        pyr.append(pooled)
        cur = pooled
    return pyr


if __name__ == "__main__":
    key = jax.random.PRNGKey(0)
    x = jax.random.normal(key, (2, 4, 16, 16), dtype=jnp.float32)

    pyr = enhanced_pyramid(x, levels=LEVELS)
    pyr = [jax.block_until_ready(p) for p in pyr]

    ref = _ref_pyramid(x, levels=LEVELS)
    assert len(pyr) == len(ref)
    for got, want in zip(pyr, ref):
        assert got.shape == want.shape, (got.shape, want.shape)
        assert jnp.allclose(got, want, atol=1e-5, rtol=1e-5), "mismatch vs reference"

    print("KERNEL_OK")
</pallas_src>

<mosaic_0001>
module attributes {stable_mosaic.version = 11 : i64} {
  func.func @kernel(%arg0: i32, %arg1: memref<4x16x16xf32, #tpu.memory_space<vmem>>, %arg2: memref<8x16xf32, #tpu.memory_space<vmem>>, %arg3: memref<16x8xf32, #tpu.memory_space<vmem>>, %arg4: memref<4x8xf32, #tpu.memory_space<vmem>>, %arg5: memref<8x4xf32, #tpu.memory_space<vmem>>, %arg6: memref<4x8x8xf32, #tpu.memory_space<vmem>>, %arg7: memref<4x4x4xf32, #tpu.memory_space<vmem>>) attributes {dimension_semantics = [#tpu.dimension_semantics<parallel>], iteration_bounds = array<i64: 2>, scalar_prefetch = 0 : i64, scratch_operands = 0 : i64, tpu.core_type = #tpu.core_type<tc>, window_params = [{transform_indices = @transform_0, window_bounds = array<i64: 4, 16, 16>}, {pipeline_mode = #tpu.pipeline_mode<synchronous>, transform_indices = @transform_1, window_bounds = array<i64: 8, 16>}, {pipeline_mode = #tpu.pipeline_mode<synchronous>, transform_indices = @transform_2, window_bounds = array<i64: 16, 8>}, {pipeline_mode = #tpu.pipeline_mode<synchronous>, transform_indices = @transform_3, window_bounds = array<i64: 4, 8>}, {pipeline_mode = #tpu.pipeline_mode<synchronous>, transform_indices = @transform_4, window_bounds = array<i64: 8, 4>}, {transform_indices = @transform_5, window_bounds = array<i64: 4, 8, 8>}, {transform_indices = @transform_6, window_bounds = array<i64: 4, 4, 4>}]} {
    %c0 = arith.constant 0 : index
    %c0_0 = arith.constant 0 : index
    %c0_1 = arith.constant 0 : index
    %0 = vector.load %arg1[%c0, %c0_0, %c0_1] : memref<4x16x16xf32, #tpu.memory_space<vmem>>, vector<4x16x16xf32>
    %c0_2 = arith.constant 0 : index
    %c0_3 = arith.constant 0 : index
    %1 = vector.load %arg2[%c0_2, %c0_3] : memref<8x16xf32, #tpu.memory_space<vmem>>, vector<8x16xf32>
    %c0_4 = arith.constant 0 : index
    %c0_5 = arith.constant 0 : index
    %2 = vector.load %arg3[%c0_4, %c0_5] : memref<16x8xf32, #tpu.memory_space<vmem>>, vector<16x8xf32>
    %3 = vector.shape_cast %2 : vector<16x8xf32> to vector<1x16x8xf32>
    %4 = vector.shape_cast %3 : vector<1x16x8xf32> to vector<1x16x8xf32>
    %5 = vector.broadcast %4 : vector<1x16x8xf32> to vector<4x16x8xf32>
    "tpu.trace_start"() <{level = 10 : i32, message = "bhw,bwv->bhv"}> : () -> ()
    %cst = arith.constant dense<0.000000e+00> : vector<4x16x8xf32>
    %6 = tpu.matmul %0, %5, %cst {dimension_numbers = #tpu.dot_dimension_numbers<[2], [1], [1], [2], [0, 0, 0, 1, 1, 2], [0], [0]>} : vector<4x16x16xf32>, vector<4x16x8xf32>, vector<4x16x8xf32> -> vector<4x16x8xf32>
    "tpu.trace_stop"() : () -> ()
    %7 = vector.shape_cast %1 : vector<8x16xf32> to vector<1x8x16xf32>
    %8 = vector.shape_cast %7 : vector<1x8x16xf32> to vector<1x8x16xf32>
    %9 = vector.broadcast %8 : vector<1x8x16xf32> to vector<4x8x16xf32>
    "tpu.trace_start"() <{level = 10 : i32, message = "boh,bhv->bov"}> : () -> ()
    %cst_6 = arith.constant dense<0.000000e+00> : vector<4x8x8xf32>
    %10 = tpu.matmul %9, %6, %cst_6 {dimension_numbers = #tpu.dot_dimension_numbers<[2], [1], [1], [2], [0, 0, 0, 1, 1, 2], [0], [0]>} : vector<4x8x16xf32>, vector<4x16x8xf32>, vector<4x8x8xf32> -> vector<4x8x8xf32>
    "tpu.trace_stop"() : () -> ()
    %c0_7 = arith.constant 0 : index
    %c0_8 = arith.constant 0 : index
    %c0_9 = arith.constant 0 : index
    %11 = vector.load %arg6[%c0_7, %c0_8, %c0_9] : memref<4x8x8xf32, #tpu.memory_space<vmem>>, vector<4x8x8xf32>
    tpu.vector_store %arg6[%c0_7, %c0_8, %c0_9], %10 {strides = array<i32>} : memref<4x8x8xf32, #tpu.memory_space<vmem>>, vector<4x8x8xf32>,
    %c0_10 = arith.constant 0 : index
    %c0_11 = arith.constant 0 : index
    %12 = vector.load %arg4[%c0_10, %c0_11] : memref<4x8xf32, #tpu.memory_space<vmem>>, vector<4x8xf32>
    %c0_12 = arith.constant 0 : index
    %c0_13 = arith.constant 0 : index
    %13 = vector.load %arg5[%c0_12, %c0_13] : memref<8x4xf32, #tpu.memory_space<vmem>>, vector<8x4xf32>
    %14 = vector.shape_cast %13 : vector<8x4xf32> to vector<1x8x4xf32>
    %15 = vector.shape_cast %14 : vector<1x8x4xf32> to vector<1x8x4xf32>
    %16 = vector.broadcast %15 : vector<1x8x4xf32> to vector<4x8x4xf32>
    "tpu.trace_start"() <{level = 10 : i32, message = "bhw,bwv->bhv"}> : () -> ()
    %cst_14 = arith.constant dense<0.000000e+00> : vector<4x8x4xf32>
    %17 = tpu.matmul %10, %16, %cst_14 {dimension_numbers = #tpu.dot_dimension_numbers<[2], [1], [1], [2], [0, 0, 0, 1, 1, 2], [0], [0]>} : vector<4x8x8xf32>, vector<4x8x4xf32>, vector<4x8x4xf32> -> vector<4x8x4xf32>
    "tpu.trace_stop"() : () -> ()
    %18 = vector.shape_cast %12 : vector<4x8xf32> to vector<1x4x8xf32>
    %19 = vector.shape_cast %18 : vector<1x4x8xf32> to vector<1x4x8xf32>
    %20 = vector.broadcast %19 : vector<1x4x8xf32> to vector<4x4x8xf32>
    "tpu.trace_start"() <{level = 10 : i32, message = "boh,bhv->bov"}> : () -> ()
    %cst_15 = arith.constant dense<0.000000e+00> : vector<4x4x4xf32>
    %21 = tpu.matmul %20, %17, %cst_15 {dimension_numbers = #tpu.dot_dimension_numbers<[2], [1], [1], [2], [0, 0, 0, 1, 1, 2], [0], [0]>} : vector<4x4x8xf32>, vector<4x8x4xf32>, vector<4x4x4xf32> -> vector<4x4x4xf32>
    "tpu.trace_stop"() : () -> ()
    %c0_16 = arith.constant 0 : index
    %c0_17 = arith.constant 0 : index
    %c0_18 = arith.constant 0 : index
    %22 = vector.load %arg7[%c0_16, %c0_17, %c0_18] : memref<4x4x4xf32, #tpu.memory_space<vmem>>, vector<4x4x4xf32>
    tpu.vector_store %arg7[%c0_16, %c0_17, %c0_18], %21 {strides = array<i32>} : memref<4x4x4xf32, #tpu.memory_space<vmem>>, vector<4x4x4xf32>,
    return
  }
  func.func @transform_0(%arg0: i32) -> (i32, i32, i32) {
    %c0_i32 = arith.constant 0 : i32
    %c0_i32_0 = arith.constant 0 : i32
    %c0_i32_1 = arith.constant 0 : i32
    return %arg0, %c0_i32, %c0_i32_0 : i32, i32, i32
  }
  func.func @transform_1(%arg0: i32) -> (i32, i32) {
    %c0_i32 = arith.constant 0 : i32
    %c0_i32_0 = arith.constant 0 : i32
    %c0_i32_1 = arith.constant 0 : i32
    return %c0_i32, %c0_i32_0 : i32, i32
  }
  func.func @transform_2(%arg0: i32) -> (i32, i32) {
    %c0_i32 = arith.constant 0 : i32
    %c0_i32_0 = arith.constant 0 : i32
    %c0_i32_1 = arith.constant 0 : i32
    return %c0_i32, %c0_i32_0 : i32, i32
  }
  func.func @transform_3(%arg0: i32) -> (i32, i32) {
    %c0_i32 = arith.constant 0 : i32
    %c0_i32_0 = arith.constant 0 : i32
    %c0_i32_1 = arith.constant 0 : i32
    return %c0_i32, %c0_i32_0 : i32, i32
  }
  func.func @transform_4(%arg0: i32) -> (i32, i32) {
    %c0_i32 = arith.constant 0 : i32
    %c0_i32_0 = arith.constant 0 : i32
    %c0_i32_1 = arith.constant 0 : i32
    return %c0_i32, %c0_i32_0 : i32, i32
  }
  func.func @transform_5(%arg0: i32) -> (i32, i32, i32) {
    %c0_i32 = arith.constant 0 : i32
    %c0_i32_0 = arith.constant 0 : i32
    %c0_i32_1 = arith.constant 0 : i32
    return %arg0, %c0_i32, %c0_i32_0 : i32, i32, i32
  }
  func.func @transform_6(%arg0: i32) -> (i32, i32, i32) {
    %c0_i32 = arith.constant 0 : i32
    %c0_i32_0 = arith.constant 0 : i32
    %c0_i32_1 = arith.constant 0 : i32
    return %arg0, %c0_i32, %c0_i32_0 : i32, i32, i32
  }
}

</mosaic_0001>

<llo_original>
// kernel: tpu_custom_call.1
$region0: #{tpu_custom_call.1}
  #allocation0 [shape = 'u32[]', space=smem, size = 0x4, offset = 0x4, fixed_abs, tag = 'smem constant byte address 0x4 - core index']
  #allocation1 [shape = 'u32[72,128]{1,0:T(1,128)}', space=vmem, size = 0x9000, scoped, tag = 'internal scratch']
  %s0 = inlined_call_operand.hbm [shape: f32[8,16,16], index: 0, kind: input, shape index: {}]
  %s1 = inlined_call_operand.vmem [shape: f32[8,16], index: 1, kind: input, shape index: {}]
  %s2 = inlined_call_operand.vmem [shape: f32[16,8], index: 2, kind: input, shape index: {}]
  %s3 = inlined_call_operand.vmem [shape: f32[4,8], index: 3, kind: input, shape index: {}]
  %s4 = inlined_call_operand.vmem [shape: f32[8,4], index: 4, kind: input, shape index: {}]
  %s5 = inlined_call_operand.hbm [shape: f32[8,8,8], index: 5, kind: output, shape index: {0}]
  %s6 = inlined_call_operand.vmem [shape: f32[8,4,4], index: 6, kind: output, shape index: {1}]
  %7 = xla_tuple %s5, %s6
  %s8 = sld [smem:[#allocation0]]
  $region65: #{tpu_custom_call.1} parent=0
    _
  %s10 = ssub.s32 1, %s8
  %s11 = scalar_select 0, %s10, %s8
  $region1: #{tpu_custom_call.1} parent=0
    #allocation2 [shape = 'u8[65536]{0}', space=vmem, size = 0x10000, scoped, tag = 'input window, operand 0']
    #allocation3 [shape = 's32[2]{0}', space=sflag, size = 0x8, scoped, tag = 'scoped memory for tpu_custom_call.1']
    #allocation4 [shape = 's32[2]{0}', space=sflag, size = 0x8, scoped, tag = 'scoped memory for tpu_custom_call.1']
    #allocation5 [shape = 'u8[32768]{0}', space=vmem, size = 0x8000, scoped, tag = 'output window, operand 0']
    %12 = vsyncpa [#allocation3], 0
    %s13 = scalar_lea.sflag [#allocation3], 1
    %14 = vsyncpa %s13, 0
    %15 = vsyncpa [#allocation4], 0
    %s16 = scalar_lea.sflag [#allocation4], 1
    %17 = vsyncpa %s16, 0
    loop: start=0, step=1, limit=4
    $region2: #{tpu_custom_call.1} parent=1 // loop_pre_header
      _
    $region3: #{tpu_custom_call.1} parent=1 // loop_header
      %s19 = sphi 0, %s23
      %p20 = scmp.ge.s32.totalorder %s19, 4
      %s29 = sphi 0, %s31
      %s32 = sphi 0, %s29
      %s33 = sphi 0, %s32
      %s49 = sphi 0, %s33
      %s53 = sphi 0, %s53
      %s55 = sphi 0, %s53
      %s56 = sphi 0, %s55
      %s70 = sphi 0, %s56
      %s74 = sphi 0, %s74
      %s76 = sphi 0, %s74
      %s77 = sphi 0, %s76
      %s91 = sphi 0, %s77
      %s95 = sphi 0, %s95
      %s97 = sphi 0, %s95
      %s98 = sphi 0, %s97
      %s112 = sphi 0, %s98
      %s116 = sphi 0, %s116
      %s118 = sphi 0, %s116
      %s119 = sphi 0, %s118
      %s133 = sphi 0, %s119
      %s139 = sphi 0, %s141
      %s142 = sphi 0, %s139
      %s143 = sphi 0, %s142
      %s159 = sphi 0, %s143
      %s165 = sphi 0, %s167
      %s168 = sphi 0, %s165
      %s169 = sphi 0, %s168
      %s185 = sphi 0, %s169
    $region4: #{tpu_custom_call.1} parent=1 // loop_header_branch
      %22 = sbr.rel (%p20) target = $region8
    $region5: #{tpu_custom_call.1} parent=1 // loop_body
      %s24 = ssub.s32 %s19, 1
      %s25 = ssub.s32 %s19, 2
      %s26 = sadd.s32 %s19, 1
      %s27 = ssub.s32 %s19, %s26
      %p28 = scmp.eq.s32.totalorder %s27, 0
      %s30 = sadd.s32 %s29, 1
      %s31 = scalar_select %p28, %s29, %s30
      %p34 = pneg %p28
      %p35 = scmp.eq.s32.totalorder %s19, 1
      %p36 = por %p34, %p35
      %p37 = scmp.ne.s32.totalorder %s29, %s32
      %p38 = scmp.eq.s32.totalorder %s19, 0
      %p39 = por %p37, %p38
      %p40 = scmp.ne.s32.totalorder %s29, %s32
      %p41 = scmp.eq.s32.totalorder %s24, 1
      %p42 = por %p40, %p41
      %p43 = scmp.ne.s32.totalorder %s32, %s33
      %p44 = scmp.eq.s32.totalorder %s24, 0
      %p45 = por %p43, %p44
      %p46 = scmp.ne.s32.totalorder %s32, %s33
      %p47 = scmp.eq.s32.totalorder %s25, 1
      %p48 = por %p46, %p47
      %p50 = scmp.ne.s32.totalorder %s33, %s49
      %p51 = scmp.eq.s32.totalorder %s25, 0
      %p52 = por %p50, %p51
      %s54 = sadd.s32 %s53, 1
      %p57 = scmp.eq.s32.totalorder %s19, 1
      %p58 = scmp.ne.s32.totalorder %s53, %s55
      %p59 = scmp.eq.s32.totalorder %s19, 0
      %p60 = por %p58, %p59
      %p61 = scmp.ne.s32.totalorder %s53, %s55
      %p62 = scmp.eq.s32.totalorder %s24, 1
      %p63 = por %p61, %p62
      %p64 = scmp.ne.s32.totalorder %s55, %s56
      %p65 = scmp.eq.s32.totalorder %s24, 0
      %p66 = por %p64, %p65
      %p67 = scmp.ne.s32.totalorder %s55, %s56
      %p68 = scmp.eq.s32.totalorder %s25, 1
      %p69 = por %p67, %p68
      %p71 = scmp.ne.s32.totalorder %s56, %s70
      %p72 = scmp.eq.s32.totalorder %s25, 0
      %p73 = por %p71, %p72
      %s75 = sadd.s32 %s74, 1
      %p78 = scmp.eq.s32.totalorder %s19, 1
      %p79 = scmp.ne.s32.totalorder %s74, %s76
      %p80 = scmp.eq.s32.totalorder %s19, 0
      %p81 = por %p79, %p80
      %p82 = scmp.ne.s32.totalorder %s74, %s76
      %p83 = scmp.eq.s32.totalorder %s24, 1
      %p84 = por %p82, %p83
      %p85 = scmp.ne.s32.totalorder %s76, %s77
      %p86 = scmp.eq.s32.totalorder %s24, 0
      %p87 = por %p85, %p86
      %p88 = scmp.ne.s32.totalorder %s76, %s77
      %p89 = scmp.eq.s32.totalorder %s25, 1
      %p90 = por %p88, %p89
      %p92 = scmp.ne.s32.totalorder %s77, %s91
      %p93 = scmp.eq.s32.totalorder %s25, 0
      %p94 = por %p92, %p93
      %s96 = sadd.s32 %s95, 1
      %p99 = scmp.eq.s32.totalorder %s19, 1
      %p100 = scmp.ne.s32.totalorder %s95, %s97
      %p101 = scmp.eq.s32.totalorder %s19, 0
      %p102 = por %p100, %p101
      %p103 = scmp.ne.s32.totalorder %s95, %s97
      %p104 = scmp.eq.s32.totalorder %s24, 1
      %p105 = por %p103, %p104
      %p106 = scmp.ne.s32.totalorder %s97, %s98
      %p107 = scmp.eq.s32.totalorder %s24, 0
      %p108 = por %p106, %p107
      %p109 = scmp.ne.s32.totalorder %s97, %s98
      %p110 = scmp.eq.s32.totalorder %s25, 1
      %p111 = por %p109, %p110
      %p113 = scmp.ne.s32.totalorder %s98, %s112
      %p114 = scmp.eq.s32.totalorder %s25, 0
      %p115 = por %p113, %p114
      %s117 = sadd.s32 %s116, 1
      %p120 = scmp.eq.s32.totalorder %s19, 1
      %p121 = scmp.ne.s32.totalorder %s116, %s118
      %p122 = scmp.eq.s32.totalorder %s19, 0
      %p123 = por %p121, %p122
      %p124 = scmp.ne.s32.totalorder %s116, %s118
      %p125 = scmp.eq.s32.totalorder %s24, 1
      %p126 = por %p124, %p125
      %p127 = scmp.ne.s32.totalorder %s118, %s119
      %p128 = scmp.eq.s32.totalorder %s24, 0
      %p129 = por %p127, %p128
      %p130 = scmp.ne.s32.totalorder %s118, %s119
      %p131 = scmp.eq.s32.totalorder %s25, 1
      %p132 = por %p130, %p131
      %p134 = scmp.ne.s32.totalorder %s119, %s133
      %p135 = scmp.eq.s32.totalorder %s25, 0
      %p136 = por %p134, %p135
      %s137 = ssub.s32 %s19, %s26
      %p138 = scmp.eq.s32.totalorder %s137, 0
      %s140 = sadd.s32 %s139, 1
      %s141 = scalar_select %p138, %s139, %s140
      %p144 = pneg %p138
      %p145 = scmp.eq.s32.totalorder %s19, 1
      %p146 = por %p144, %p145
      %p147 = scmp.ne.s32.totalorder %s139, %s142
      %p148 = scmp.eq.s32.totalorder %s19, 0
      %p149 = por %p147, %p148
      %p150 = scmp.ne.s32.totalorder %s139, %s142
      %p151 = scmp.eq.s32.totalorder %s24, 1
      %p152 = por %p150, %p151
      %p153 = scmp.ne.s32.totalorder %s142, %s143
      %p154 = scmp.eq.s32.totalorder %s24, 0
      %p155 = por %p153, %p154
      %p156 = scmp.ne.s32.totalorder %s142, %s143
      %p157 = scmp.eq.s32.totalorder %s25, 1
      %p158 = por %p156, %p157
      %p160 = scmp.ne.s32.totalorder %s143, %s159
      %p161 = scmp.eq.s32.totalorder %s25, 0
      %p162 = por %p160, %p161
      %s163 = ssub.s32 %s19, %s26
      %p164 = scmp.eq.s32.totalorder %s163, 0
      %s166 = sadd.s32 %s165, 1
      %s167 = scalar_select %p164, %s165, %s166
      %p170 = pneg %p164
      %p171 = scmp.eq.s32.totalorder %s19, 1
      %p172 = por %p170, %p171
      %p173 = scmp.ne.s32.totalorder %s165, %s168
      %p174 = scmp.eq.s32.totalorder %s19, 0
      %p175 = por %p173, %p174
      %p176 = scmp.ne.s32.totalorder %s165, %s168
      %p177 = scmp.eq.s32.totalorder %s24, 1
      %p178 = por %p176, %p177
      %p179 = scmp.ne.s32.totalorder %s168, %s169
      %p180 = scmp.eq.s32.totalorder %s24, 0
      %p181 = por %p179, %p180
      %p182 = scmp.ne.s32.totalorder %s168, %s169
      %p183 = scmp.eq.s32.totalorder %s25, 1
      %p184 = por %p182, %p183
      %p186 = scmp.ne.s32.totalorder %s169, %s185
      %p187 = scmp.eq.s32.totalorder %s25, 0
      %p188 = por %p186, %p187
      %p189 = scmp.le.s32.totalorder 1, %s19
      %p190 = scmp.lt.s32.totalorder %s19, 3
      %p191 = pnand %p189, %p190
      %p192 = pneg %p191
      // Predicated region
      $region9: #{tpu_custom_call.1} parent=5 // pred_check
        _
      $region10: #{tpu_custom_call.1} parent=5 // pred_check_branch
        %194 = sbr.rel (%p191) target = $region12
      $region11: #{tpu_custom_call.1} parent=5 // pred_region
        %s195 = ssub.s32 %s19, 1
        // Predicated region
        $region13: #{tpu_custom_call.1} parent=11 // pred_check
          %p196 = pneg %p66
        $region14: #{tpu_custom_call.1} parent=11 // pred_check_branch
          %198 = sbr.rel (%p196) target = $region16
        $region15: #{tpu_custom_call.1} parent=11 // pred_region
          _
        $region16: #{tpu_custom_call.1} parent=11 // pred_fallthru
          _
        // Predicated region
        $region17: #{tpu_custom_call.1} parent=11 // pred_check
          %p199 = pneg %p87
        $region18: #{tpu_custom_call.1} parent=11 // pred_check_branch
          %201 = sbr.rel (%p199) target = $region20
        $region19: #{tpu_custom_call.1} parent=11 // pred_region
          _
        $region20: #{tpu_custom_call.1} parent=11 // pred_fallthru
          _
        // Predicated region
        $region21: #{tpu_custom_call.1} parent=11 // pred_check
          %p202 = pneg %p108
        $region22: #{tpu_custom_call.1} parent=11 // pred_check_branch
          %204 = sbr.rel (%p202) target = $region24
        $region23: #{tpu_custom_call.1} parent=11 // pred_region
          _
        $region24: #{tpu_custom_call.1} parent=11 // pred_fallthru
          _
        // Predicated region
        $region25: #{tpu_custom_call.1} parent=11 // pred_check
          %p205 = pneg %p129
        $region26: #{tpu_custom_call.1} parent=11 // pred_check_branch
          %207 = sbr.rel (%p205) target = $region28
        $region27: #{tpu_custom_call.1} parent=11 // pred_region
          _
        $region28: #{tpu_custom_call.1} parent=11 // pred_fallthru
          _
      $region12: #{tpu_custom_call.1} parent=5 // pred_fallthru
        _
      %p208 = scmp.lt.s32.totalorder %s19, 2
      // Predicated region
      $region29: #{tpu_custom_call.1} parent=5 // pred_check
        %p209 = pneg %p208
      $region30: #{tpu_custom_call.1} parent=5 // pred_check_branch
        %211 = sbr.rel (%p209) target = $region32
      $region31: #{tpu_custom_call.1} parent=5 // pred_region
        // Predicated region
        $region33: #{tpu_custom_call.1} parent=31 // pred_check
          %p212 = pneg %p39
        $region34: #{tpu_custom_call.1} parent=31 // pred_check_branch
          %214 = sbr.rel (%p212) target = $region36
        $region35: #{tpu_custom_call.1} parent=31 // pred_region
          %s215 = sand.u32 %s29, 1
          %s216 = scalar_lea.sflag [#allocation3], %s215
          %s217 = sand.u32 %s29, 1
          %s218 = smul.addr %s217, 64
          %s219 = scalar_lea.vmem [#allocation2], %s218
          %s220 = smul.u32 4, %s19
          %222 = vsyncadd %s216, 0
          %s223 = smul.addr %s220, 2
          %s224 = smul.addr %s223, 8
          %s225 = scalar_lea.hbm %s0, %s224
          %s226 = sshll.u32 %s225, 4
          %s227 = int_to_ptr.hbm [resolvable:$true] %s226
          %s228 = sshll.u32 %s219, 4
          %s229 = int_to_ptr.vmem [resolvable:$true] %s228
          %234 = dma.hbm_to_vmem [thread:$0]  %s227, 1024, %s229, %s216, 128, 128, 8
        $region36: #{tpu_custom_call.1} parent=31 // pred_fallthru
          _
      $region32: #{tpu_custom_call.1} parent=5 // pred_fallthru
        _
      %p235 = scmp.le.s32.totalorder 1, %s19
      %p236 = scmp.lt.s32.totalorder %s19, 3
      %p237 = pnand %p235, %p236
      %p238 = pneg %p237
      // Predicated region
      $region37: #{tpu_custom_call.1} parent=5 // pred_check
        _
      $region38: #{tpu_custom_call.1} parent=5 // pred_check_branch
        %240 = sbr.rel (%p237) target = $region40
      $region39: #{tpu_custom_call.1} parent=5 // pred_region
        %s241 = ssub.s32 %s19, 1
        %s242 = sand.u32 %s32, 1
        %s243 = scalar_lea.sflag [#allocation3], %s242
        %s244 = sand.u32 %s32, 1
        %s245 = smul.addr %s244, 64
        %s246 = scalar_lea.vmem [#allocation2], %s245
        // Predicated region
        $region41: #{tpu_custom_call.1} parent=39 // pred_check
          %p247 = pneg %p45
        $region42: #{tpu_custom_call.1} parent=39 // pred_check_branch
          %249 = sbr.rel (%p247) target = $region44
        $region43: #{tpu_custom_call.1} parent=39 // pred_region
          %251 = dma.done %s243, 1024
        $region44: #{tpu_custom_call.1} parent=39 // pred_fallthru
          _
        %s252 = sand.u32 %s32, 1
        %s253 = scalar_lea.sflag [#allocation3], %s252
        %s254 = sand.u32 %s32, 1
        %s255 = smul.addr %s254, 64
        %s256 = scalar_lea.vmem [#allocation2], %s255
        %p257 = pneg %p45
        %p258 = pneg %p42
        %p259 = pneg %p66
        %p260 = pneg %p63
        %p261 = pneg %p87
        %p262 = pneg %p84
        %p263 = pneg %p108
        %p264 = pneg %p105
        %p265 = pneg %p129
        %p266 = pneg %p126
        %p267 = pneg %p155
        %p268 = pneg %p152
        %s269 = sand.u32 %s142, 1
        %s270 = scalar_lea.sflag [#allocation4], %s269
        %s271 = sand.u32 %s142, 1
        %s272 = smul.addr %s271, 32
        %s273 = scalar_lea.vmem [#allocation5], %s272
        %p274 = pneg %p181
        %p275 = pneg %p178
        %s276 = smul.u32 4, %s24
        %p277 = scmp.lt.s32.totalorder %s276, 7
        %s278 = scalar_select %p277, %s276, 7
        %s279 = smul.addr %s278, 4
        %s280 = scalar_lea.vmem %s6, %s279
        %s281 = smul.u32 4, %s24
        %s282 = smul.u32 4, %s24
        %s283 = smul.u32 4, %s24
        %p284 = scmp.lt.s32.totalorder %s283, 7
        %s285 = scalar_select %p284, %s283, 7
        %s286 = smul.addr %s285, 4
        %s287 = scalar_lea.vmem %s6, %s286
        %s288 = smul.u32 4, %s24
        %v289 = vld [vmem:[%s246] sm:$0xff]
        %v290 = vld [vmem:[%s246 + $0x8] sm:$0xff]
        %v291 = vld [vmem:[%s246 + $0x10] sm:$0xff]
        %v292 = vld [vmem:[%s246 + $0x18] sm:$0xff]
        %v293 = vld [vmem:[%s246 + $0x20] sm:$0xff]
        %v294 = vld [vmem:[%s246 + $0x28] sm:$0xff]
        %v295 = vld [vmem:[%s246 + $0x30] sm:$0xff]
        %v296 = vld [vmem:[%s246 + $0x38] sm:$0xff]
        %v297 = vld [vmem:[%s1] sm:$0xff]
        %v298 = vld [vmem:[%s2] sm:$0xff]
        %v299 = vld [vmem:[%s2 + $0x8] sm:$0xff]
        %vm300 = vcmask 130048
        %v302 = vsel %vm300, %v289, 0
        %v305 = vsel %vm300, %v290, 0
        %307 = vmatpush.msra.mxu0 0.0
        %308 = vmatpush.msra.mxu0 0.0
        %309 = vmatpush.msra.mxu0 0.0
        %310 = vmatpush.msra.mxu0 0.0
        %311 = vmatpush.msra.mxu0 0.0
        %312 = vmatpush.msra.mxu0 0.0
        %313 = vmatpush.msra.mxu0 0.0
        %314 = vmatpush.msra.mxu0 0.0
        %315 = vmatpush.msra.mxu0 0.0
        %316 = vmatpush.msra.mxu0 0.0
        %317 = vmatpush.msra.mxu0 0.0
        %318 = vmatpush.msra.mxu0 0.0
        %319 = vmatpush.msra.mxu0 0.0
        %320 = vmatpush.msra.mxu0 0.0
        %321 = vmatpush.msra.mxu0 %v299
        %322 = vmatpush.msra.mxu0 %v298
        %323 = vmatmul.f32.gmra.mxu0 %v302
        %v324 = vpop.f32.mrf.mxu0
        %v325 = vadd.f32 0.0, %v324
        %326 = vmatmul.f32.gmra.mxu0 %v305
        %v327 = vpop.f32.mrf.mxu0
        %v328 = vadd.f32 0.0, %v327
        %329 = vdwg.mxu0
        %v331 = vsel %vm300, %v291, 0
        %v334 = vsel %vm300, %v292, 0
        %336 = vmatpush.msra.mxu0 0.0
        %337 = vmatpush.msra.mxu0 0.0
        %338 = vmatpush.msra.mxu0 0.0
        %339 = vmatpush.msra.mxu0 0.0
        %340 = vmatpush.msra.mxu0 0.0
        %341 = vmatpush.msra.mxu0 0.0
        %342 = vmatpush.msra.mxu0 0.0
        %343 = vmatpush.msra.mxu0 0.0
        %344 = vmatpush.msra.mxu0 0.0
        %345 = vmatpush.msra.mxu0 0.0
        %346 = vmatpush.msra.mxu0 0.0
        %347 = vmatpush.msra.mxu0 0.0
        %348 = vmatpush.msra.mxu0 0.0
        %349 = vmatpush.msra.mxu0 0.0
        %350 = vmatpush.msra.mxu0 %v299
        %351 = vmatpush.msra.mxu0 %v298
        %352 = vmatmul.f32.gmra.mxu0 %v331
        %v353 = vpop.f32.mrf.mxu0
        %v354 = vadd.f32 0.0, %v353
        %355 = vmatmul.f32.gmra.mxu0 %v334
        %v356 = vpop.f32.mrf.mxu0
        %v357 = vadd.f32 0.0, %v356
        %358 = vdwg.mxu0
        %v360 = vsel %vm300, %v293, 0
        %v363 = vsel %vm300, %v294, 0
        %365 = vmatpush.msra.mxu0 0.0
        %366 = vmatpush.msra.mxu0 0.0
        %367 = vmatpush.msra.mxu0 0.0
        %368 = vmatpush.msra.mxu0 0.0
        %369 = vmatpush.msra.mxu0 0.0
        %370 = vmatpush.msra.mxu0 0.0
        %371 = vmatpush.msra.mxu0 0.0
        %372 = vmatpush.msra.mxu0 0.0
        %373 = vmatpush.msra.mxu0 0.0
        %374 = vmatpush.msra.mxu0 0.0
        %375 = vmatpush.msra.mxu0 0.0
        %376 = vmatpush.msra.mxu0 0.0
        %377 = vmatpush.msra.mxu0 0.0
        %378 = vmatpush.msra.mxu0 0.0
        %379 = vmatpush.msra.mxu0 %v299
        %380 = vmatpush.msra.mxu0 %v298
        %381 = vmatmul.f32.gmra.mxu0 %v360
        %v382 = vpop.f32.mrf.mxu0
        %v383 = vadd.f32 0.0, %v382
        %384 = vmatmul.f32.gmra.mxu0 %v363
        %v385 = vpop.f32.mrf.mxu0
        %v386 = vadd.f32 0.0, %v385
        %387 = vdwg.mxu0
        %v389 = vsel %vm300, %v295, 0
        %v392 = vsel %vm300, %v296, 0
        %394 = vmatpush.msra.mxu0 0.0
        %395 = vmatpush.msra.mxu0 0.0
        %396 = vmatpush.msra.mxu0 0.0
        %397 = vmatpush.msra.mxu0 0.0
        %398 = vmatpush.msra.mxu0 0.0
        %399 = vmatpush.msra.mxu0 0.0
        %400 = vmatpush.msra.mxu0 0.0
        %401 = vmatpush.msra.mxu0 0.0
        %402 = vmatpush.msra.mxu0 0.0
        %403 = vmatpush.msra.mxu0 0.0
        %404 = vmatpush.msra.mxu0 0.0
        %405 = vmatpush.msra.mxu0 0.0
        %406 = vmatpush.msra.mxu0 0.0
        %407 = vmatpush.msra.mxu0 0.0
        %408 = vmatpush.msra.mxu0 %v299
        %409 = vmatpush.msra.mxu0 %v298
        %410 = vmatmul.f32.gmra.mxu0 %v389
        %v411 = vpop.f32.mrf.mxu0
        %v412 = vadd.f32 0.0, %v411
        %413 = vmatmul.f32.gmra.mxu0 %v392
        %v414 = vpop.f32.mrf.mxu0
        %v415 = vadd.f32 0.0, %v414
        %416 = vdwg.mxu0
        %v418 = vsel %vm300, %v297, 0
        %420 = vmatpush.msra.mxu0 0.0
        %421 = vmatpush.msra.mxu0 0.0
        %422 = vmatpush.msra.mxu0 0.0
        %423 = vmatpush.msra.mxu0 0.0
        %424 = vmatpush.msra.mxu0 0.0
        %425 = vmatpush.msra.mxu0 0.0
        %426 = vmatpush.msra.mxu0 0.0
        %427 = vmatpush.msra.mxu0 0.0
        %428 = vmatpush.msra.mxu0 0.0
        %429 = vmatpush.msra.mxu0 0.0
        %430 = vmatpush.msra.mxu0 0.0
        %431 = vmatpush.msra.mxu0 0.0
        %432 = vmatpush.msra.mxu0 0.0
        %433 = vmatpush.msra.mxu0 0.0
        %434 = vmatpush.msra.mxu0 %v328
        %435 = vmatpush.msra.mxu0 %v325
        %436 = vmatmul.f32.gmra.mxu0 %v418
        %v437 = vpop.f32.mrf.mxu0
        %v438 = vadd.f32 0.0, %v437
        %439 = vdwg.mxu0
        %440 = vmatpush.msra.mxu0 0.0
        %441 = vmatpush.msra.mxu0 0.0
        %442 = vmatpush.msra.mxu0 0.0
        %443 = vmatpush.msra.mxu0 0.0
        %444 = vmatpush.msra.mxu0 0.0
        %445 = vmatpush.msra.mxu0 0.0
        %446 = vmatpush.msra.mxu0 0.0
        %447 = vmatpush.msra.mxu0 0.0
        %448 = vmatpush.msra.mxu0 0.0
        %449 = vmatpush.msra.mxu0 0.0
        %450 = vmatpush.msra.mxu0 0.0
        %451 = vmatpush.msra.mxu0 0.0
        %452 = vmatpush.msra.mxu0 0.0
        %453 = vmatpush.msra.mxu0 0.0
        %454 = vmatpush.msra.mxu0 %v357
        %455 = vmatpush.msra.mxu0 %v354
        %456 = vmatmul.f32.gmra.mxu0 %v418
        %v457 = vpop.f32.mrf.mxu0
        %v458 = vadd.f32 0.0, %v457
        %459 = vdwg.mxu0
        %460 = vmatpush.msra.mxu0 0.0
        %461 = vmatpush.msra.mxu0 0.0
        %462 = vmatpush.msra.mxu0 0.0
        %463 = vmatpush.msra.mxu0 0.0
        %464 = vmatpush.msra.mxu0 0.0
        %465 = vmatpush.msra.mxu0 0.0
        %466 = vmatpush.msra.mxu0 0.0
        %467 = vmatpush.msra.mxu0 0.0
        %468 = vmatpush.msra.mxu0 0.0
        %469 = vmatpush.msra.mxu0 0.0
        %470 = vmatpush.msra.mxu0 0.0
        %471 = vmatpush.msra.mxu0 0.0
        %472 = vmatpush.msra.mxu0 0.0
        %473 = vmatpush.msra.mxu0 0.0
        %474 = vmatpush.msra.mxu0 %v386
        %475 = vmatpush.msra.mxu0 %v383
        %476 = vmatmul.f32.gmra.mxu0 %v418
        %v477 = vpop.f32.mrf.mxu0
        %v478 = vadd.f32 0.0, %v477
        %479 = vdwg.mxu0
        %480 = vmatpush.msra.mxu0 0.0
        %481 = vmatpush.msra.mxu0 0.0
        %482 = vmatpush.msra.mxu0 0.0
        %483 = vmatpush.msra.mxu0 0.0
        %484 = vmatpush.msra.mxu0 0.0
        %485 = vmatpush.msra.mxu0 0.0
        %486 = vmatpush.msra.mxu0 0.0
        %487 = vmatpush.msra.mxu0 0.0
        %488 = vmatpush.msra.mxu0 0.0
        %489 = vmatpush.msra.mxu0 0.0
        %490 = vmatpush.msra.mxu0 0.0
        %491 = vmatpush.msra.mxu0 0.0
        %492 = vmatpush.msra.mxu0 0.0
        %493 = vmatpush.msra.mxu0 0.0
        %494 = vmatpush.msra.mxu0 %v415
        %495 = vmatpush.msra.mxu0 %v412
        %496 = vmatmul.f32.gmra.mxu0 %v418
        %v497 = vpop.f32.mrf.mxu0
        %v498 = vadd.f32 0.0, %v497
        %499 = vdwg.mxu0
        %vm500 = vcmask 64512
        %501 = vst.msk [vmem:[%s273] sm:$0xff] %vm500, %v438
        %502 = vst.msk [vmem:[%s273 + $0x8] sm:$0xff] %vm500, %v458
        %503 = vst.msk [vmem:[%s273 + $0x10] sm:$0xff] %vm500, %v478
        %504 = vst.msk [vmem:[%s273 + $0x18] sm:$0xff] %vm500, %v498
        %v505 = vld [vmem:[%s3] sm:$0xf]
        %v506 = vld [vmem:[%s4] sm:$0xff]
        %v508 = vsel %vm500, %v438, 0
        %510 = vmatpush.msra.mxu0 0.0
        %511 = vmatpush.msra.mxu0 0.0
        %512 = vmatpush.msra.mxu0 0.0
        %513 = vmatpush.msra.mxu0 0.0
        %514 = vmatpush.msra.mxu0 0.0
        %515 = vmatpush.msra.mxu0 0.0
        %516 = vmatpush.msra.mxu0 0.0
        %517 = vmatpush.msra.mxu0 0.0
        %518 = vmatpush.msra.mxu0 0.0
        %519 = vmatpush.msra.mxu0 0.0
        %520 = vmatpush.msra.mxu0 0.0
        %521 = vmatpush.msra.mxu0 0.0
        %522 = vmatpush.msra.mxu0 0.0
        %523 = vmatpush.msra.mxu0 0.0
        %524 = vmatpush.msra.mxu0 0.0
        %525 = vmatpush.msra.mxu0 %v506
        %526 = vmatmul.f32.gmra.mxu0 %v508
        %v527 = vpop.f32.mrf.mxu0
        %v528 = vadd.f32 0.0, %v527
        %529 = vdwg.mxu0
        %v531 = vsel %vm500, %v458, 0
        %533 = vmatpush.msra.mxu0 0.0
        %534 = vmatpush.msra.mxu0 0.0
        %535 = vmatpush.msra.mxu0 0.0
        %536 = vmatpush.msra.mxu0 0.0
        %537 = vmatpush.msra.mxu0 0.0
        %538 = vmatpush.msra.mxu0 0.0
        %539 = vmatpush.msra.mxu0 0.0
        %540 = vmatpush.msra.mxu0 0.0
        %541 = vmatpush.msra.mxu0 0.0
        %542 = vmatpush.msra.mxu0 0.0
        %543 = vmatpush.msra.mxu0 0.0
        %544 = vmatpush.msra.mxu0 0.0
        %545 = vmatpush.msra.mxu0 0.0
        %546 = vmatpush.msra.mxu0 0.0
        %547 = vmatpush.msra.mxu0 0.0
        %548 = vmatpush.msra.mxu0 %v506
        %549 = vmatmul.f32.gmra.mxu0 %v531
        %v550 = vpop.f32.mrf.mxu0
        %v551 = vadd.f32 0.0, %v550
        %552 = vdwg.mxu0
        %v554 = vsel %vm500, %v478, 0
        %556 = vmatpush.msra.mxu0 0.0
        %557 = vmatpush.msra.mxu0 0.0
        %558 = vmatpush.msra.mxu0 0.0
        %559 = vmatpush.msra.mxu0 0.0
        %560 = vmatpush.msra.mxu0 0.0
        %561 = vmatpush.msra.mxu0 0.0
        %562 = vmatpush.msra.mxu0 0.0
        %563 = vmatpush.msra.mxu0 0.0
        %564 = vmatpush.msra.mxu0 0.0
        %565 = vmatpush.msra.mxu0 0.0
        %566 = vmatpush.msra.mxu0 0.0
        %567 = vmatpush.msra.mxu0 0.0
        %568 = vmatpush.msra.mxu0 0.0
        %569 = vmatpush.msra.mxu0 0.0
        %570 = vmatpush.msra.mxu0 0.0
        %571 = vmatpush.msra.mxu0 %v506
        %572 = vmatmul.f32.gmra.mxu0 %v554
        %v573 = vpop.f32.mrf.mxu0
        %v574 = vadd.f32 0.0, %v573
        %575 = vdwg.mxu0
        %v577 = vsel %vm500, %v498, 0
        %579 = vmatpush.msra.mxu0 0.0
        %580 = vmatpush.msra.mxu0 0.0
        %581 = vmatpush.msra.mxu0 0.0
        %582 = vmatpush.msra.mxu0 0.0
        %583 = vmatpush.msra.mxu0 0.0
        %584 = vmatpush.msra.mxu0 0.0
        %585 = vmatpush.msra.mxu0 0.0
        %586 = vmatpush.msra.mxu0 0.0
        %587 = vmatpush.msra.mxu0 0.0
        %588 = vmatpush.msra.mxu0 0.0
        %589 = vmatpush.msra.mxu0 0.0
        %590 = vmatpush.msra.mxu0 0.0
        %591 = vmatpush.msra.mxu0 0.0
        %592 = vmatpush.msra.mxu0 0.0
        %593 = vmatpush.msra.mxu0 0.0
        %594 = vmatpush.msra.mxu0 %v506
        %595 = vmatmul.f32.gmra.mxu0 %v577
        %v596 = vpop.f32.mrf.mxu0
        %v597 = vadd.f32 0.0, %v596
        %598 = vdwg.mxu0
        %v600 = vsel %vm500, %v505, 0
        %602 = vmatpush.msra.mxu0 0.0
        %603 = vmatpush.msra.mxu0 0.0
        %604 = vmatpush.msra.mxu0 0.0
        %605 = vmatpush.msra.mxu0 0.0
        %606 = vmatpush.msra.mxu0 0.0
        %607 = vmatpush.msra.mxu0 0.0
        %608 = vmatpush.msra.mxu0 0.0
        %609 = vmatpush.msra.mxu0 0.0
        %610 = vmatpush.msra.mxu0 0.0
        %611 = vmatpush.msra.mxu0 0.0
        %612 = vmatpush.msra.mxu0 0.0
        %613 = vmatpush.msra.mxu0 0.0
        %614 = vmatpush.msra.mxu0 0.0
        %615 = vmatpush.msra.mxu0 0.0
        %616 = vmatpush.msra.mxu0 0.0
        %617 = vmatpush.msra.mxu0 %v528
        %618 = vmatmul.f32.gmra.mxu0 %v600
        %v619 = vpop.f32.mrf.mxu0
        %v620 = vadd.f32 0.0, %v619
        %621 = vdwg.mxu0
        %622 = vmatpush.msra.mxu0 0.0
        %623 = vmatpush.msra.mxu0 0.0
        %624 = vmatpush.msra.mxu0 0.0
        %625 = vmatpush.msra.mxu0 0.0
        %626 = vmatpush.msra.mxu0 0.0
        %627 = vmatpush.msra.mxu0 0.0
        %628 = vmatpush.msra.mxu0 0.0
        %629 = vmatpush.msra.mxu0 0.0
        %630 = vmatpush.msra.mxu0 0.0
        %631 = vmatpush.msra.mxu0 0.0
        %632 = vmatpush.msra.mxu0 0.0
        %633 = vmatpush.msra.mxu0 0.0
        %634 = vmatpush.msra.mxu0 0.0
        %635 = vmatpush.msra.mxu0 0.0
        %636 = vmatpush.msra.mxu0 0.0
        %637 = vmatpush.msra.mxu0 %v551
        %638 = vmatmul.f32.gmra.mxu0 %v600
        %v639 = vpop.f32.mrf.mxu0
        %v640 = vadd.f32 0.0, %v639
        %641 = vdwg.mxu0
        %642 = vmatpush.msra.mxu0 0.0
        %643 = vmatpush.msra.mxu0 0.0
        %644 = vmatpush.msra.mxu0 0.0
        %645 = vmatpush.msra.mxu0 0.0
        %646 = vmatpush.msra.mxu0 0.0
        %647 = vmatpush.msra.mxu0 0.0
        %648 = vmatpush.msra.mxu0 0.0
        %649 = vmatpush.msra.mxu0 0.0
        %650 = vmatpush.msra.mxu0 0.0
        %651 = vmatpush.msra.mxu0 0.0
        %652 = vmatpush.msra.mxu0 0.0
        %653 = vmatpush.msra.mxu0 0.0
        %654 = vmatpush.msra.mxu0 0.0
        %655 = vmatpush.msra.mxu0 0.0
        %656 = vmatpush.msra.mxu0 0.0
        %657 = vmatpush.msra.mxu0 %v574
        %658 = vmatmul.f32.gmra.mxu0 %v600
        %v659 = vpop.f32.mrf.mxu0
        %v660 = vadd.f32 0.0, %v659
        %661 = vdwg.mxu0
        %662 = vmatpush.msra.mxu0 0.0
        %663 = vmatpush.msra.mxu0 0.0
        %664 = vmatpush.msra.mxu0 0.0
        %665 = vmatpush.msra.mxu0 0.0
        %666 = vmatpush.msra.mxu0 0.0
        %667 = vmatpush.msra.mxu0 0.0
        %668 = vmatpush.msra.mxu0 0.0
        %669 = vmatpush.msra.mxu0 0.0
        %670 = vmatpush.msra.mxu0 0.0
        %671 = vmatpush.msra.mxu0 0.0
        %672 = vmatpush.msra.mxu0 0.0
        %673 = vmatpush.msra.mxu0 0.0
        %674 = vmatpush.msra.mxu0 0.0
        %675 = vmatpush.msra.mxu0 0.0
        %676 = vmatpush.msra.mxu0 0.0
        %677 = vmatpush.msra.mxu0 %v597
        %678 = vmatmul.f32.gmra.mxu0 %v600
        %v679 = vpop.f32.mrf.mxu0
        %v680 = vadd.f32 0.0, %v679
        %681 = vdwg.mxu0
        %vm682 = vcmask 27648
        %683 = vst.msk [vmem:[%s287] sm:$0xf] %vm682, %v620
        %684 = vst.msk [vmem:[%s287 + $0x4] sm:$0xf] %vm682, %v640
        %685 = vst.msk [vmem:[%s287 + $0x8] sm:$0xf] %vm682, %v660
        %686 = vst.msk [vmem:[%s287 + $0xc] sm:$0xf] %vm682, %v680
        %s687 = sand.u32 %s142, 1
        %s688 = scalar_lea.sflag [#allocation4], %s687
        %s689 = sand.u32 %s142, 1
        %s690 = smul.addr %s689, 32
        %s691 = scalar_lea.vmem [#allocation5], %s690
        %s692 = smul.u32 4, %s24
        %p693 = scmp.lt.s32.totalorder %s692, 7
        %s694 = scalar_select %p693, %s692, 7
        %s695 = smul.addr %s694, 4
        %s696 = scalar_lea.vmem %s6, %s695
        // Predicated region
        $region45: #{tpu_custom_call.1} parent=39 // pred_check
          %p697 = pneg %p152
        $region46: #{tpu_custom_call.1} parent=39 // pred_check_branch
          %699 = sbr.rel (%p697) target = $region48
        $region47: #{tpu_custom_call.1} parent=39 // pred_region
          %s700 = smul.u32 4, %s24
          %702 = vsyncadd %s688, 0
          %s703 = smul.addr %s700, 8
          %s704 = scalar_lea.hbm %s5, %s703
          %s705 = sshll.u32 %s691, 4
          %s706 = int_to_ptr.vmem [resolvable:$true] %s705
          %s707 = sshll.u32 %s704, 4
          %s708 = int_to_ptr.hbm [resolvable:$true] %s707
          %713 = dma.vmem_to_hbm [thread:$0]  %s706, 512, %s708, %s688, 128, 128, 8
        $region48: #{tpu_custom_call.1} parent=39 // pred_fallthru
          _
        // Predicated region
        $region49: #{tpu_custom_call.1} parent=39 // pred_check
          %p714 = pneg %p178
        $region50: #{tpu_custom_call.1} parent=39 // pred_check_branch
          %716 = sbr.rel (%p714) target = $region52
        $region51: #{tpu_custom_call.1} parent=39 // pred_region
          %s717 = smul.u32 4, %s24
        $region52: #{tpu_custom_call.1} parent=39 // pred_fallthru
          _
      $region40: #{tpu_custom_call.1} parent=5 // pred_fallthru
        _
      %p718 = scmp.le.s32.totalorder 2, %s19
      // Predicated region
      $region53: #{tpu_custom_call.1} parent=5 // pred_check
        %p719 = pneg %p718
      $region54: #{tpu_custom_call.1} parent=5 // pred_check_branch
        %721 = sbr.rel (%p719) target = $region56
      $region55: #{tpu_custom_call.1} parent=5 // pred_region
        %s722 = ssub.s32 %s19, 2
        // Predicated region
        $region57: #{tpu_custom_call.1} parent=55 // pred_check
          %p723 = pneg %p158
        $region58: #{tpu_custom_call.1} parent=55 // pred_check_branch
          %725 = sbr.rel (%p723) target = $region60
        $region59: #{tpu_custom_call.1} parent=55 // pred_region
          %s726 = sand.u32 %s143, 1
          %s727 = scalar_lea.sflag [#allocation4], %s726
          %s728 = sand.u32 %s143, 1
          %s729 = smul.addr %s728, 32
          %s730 = scalar_lea.vmem [#allocation5], %s729
          %732 = dma.done %s727, 512
        $region60: #{tpu_custom_call.1} parent=55 // pred_fallthru
          _
        // Predicated region
        $region61: #{tpu_custom_call.1} parent=55 // pred_check
          %p733 = pneg %p184
        $region62: #{tpu_custom_call.1} parent=55 // pred_check_branch
          %735 = sbr.rel (%p733) target = $region64
        $region63: #{tpu_custom_call.1} parent=55 // pred_region
          %s736 = smul.u32 4, %s25
          %p737 = scmp.lt.s32.totalorder %s736, 7
          %s738 = scalar_select %p737, %s736, 7
          %s739 = smul.addr %s738, 4
          %s740 = scalar_lea.vmem %s6, %s739
        $region64: #{tpu_custom_call.1} parent=55 // pred_fallthru
          _
      $region56: #{tpu_custom_call.1} parent=5 // pred_fallthru
        _
    $region6: #{tpu_custom_call.1} parent=1 // loop_footer
      %s23 = sadd.s32 1, %s19
    $region7: #{tpu_custom_call.1} parent=1 // loop_footer_branch
      %18 = sbr.rel target = $region3
    $region8: #{tpu_custom_call.1} parent=1 // loop_exit
      _
    %741 = vsyncpa [#allocation3], 1
    %s742 = scalar_lea.sflag [#allocation3], 1
    %743 = vsyncpa %s742, 1
    %744 = vsyncpa [#allocation4], 1
    %s745 = scalar_lea.sflag [#allocation4], 1
    %746 = vsyncpa %s745, 1

</llo_original>
